<compile_context>
chip_gen: v7x
topology: tpu7x:2x2x1
jax: 0.10.0
libtpu: 0.0.40
codegen_flags: <defaults>
</compile_context>

<pallas_src>
import numpy as np
import jax
import jax.numpy as jnp
from jax import lax
from jax.experimental import pallas as pl
from jax.experimental.pallas import tpu as pltpu


_DEFAULT_TK_CAP = 32768          # lane-aligned upper bound on the contraction tile
_PRE_REDUCE_B_THRESHOLD = 8      # pre-average weights in the wrapper above this B


def _round_up(x, m):
    return (x + m - 1) // m * m


def _vmem_budget_bytes():
    """Scoped-VMEM budget: ~75% of physical, capped at 96 MiB (v5e/v6e: 128 MiB
    physical, v7x: 64 MiB). Falls back to a v7x-safe 48 MiB if the query fails."""
    try:
        cap = int(pltpu.get_tpu_info().vmem_capacity_bytes)
    except Exception:
        cap = 64 * 1024 * 1024
    return min((cap * 3) // 4, 96 * 1024 * 1024)


def _pick_tk(M_pad, T, B_eff, x_itemsize, w_itemsize, user_tk, vmem_budget):
    """Largest lane-aligned tile that divides M_pad, fits ~60% of the VMEM budget
    (double-buffered X + W streams) and respects the user/default cap."""
    per_col = 2 * (T * x_itemsize + B_eff * w_itemsize)   # 2 buffers per input stream
    cap = int(vmem_budget * 0.6) // max(per_col, 1)
    cap = min(cap, user_tk if user_tk is not None else _DEFAULT_TK_CAP, M_pad)
    cap_units = max(1, cap // 128)
    m_units = M_pad // 128
    for d in range(min(cap_units, m_units), 0, -1):
        if m_units % d == 0:
            return d * 128
    return 128


def _make_kernel(T):
    """Build the kernel body (T is a static Python int)."""
    inv_T = 1.0 / float(T)

    def kernel(x_ref, w_ref, t_ref, o_ref, zacc_ref):
        k = pl.program_id(0)

        @pl.when(k == 0)
        def _():
            zacc_ref[...] = jnp.zeros_like(zacc_ref)

        # Mean over the leading (filter) dim of the weight tile: (B, tk) -> (1, tk).
        # Computed in f32, then matched to the X stream dtype for a native MXU matmul.
        w_mean = jnp.mean(w_ref[...].astype(jnp.float32), axis=0, keepdims=True)
        w_mean = w_mean.astype(x_ref.dtype)

        # Lane-dense partial matvec: contract (1, tk) with (T, tk) -> (1, T), f32 acc.
        zacc_ref[...] += lax.dot_general(
            w_mean, x_ref[...],
            dimension_numbers=(((1,), (1,)), ((), ())),
            preferred_element_type=jnp.float32,
        )

        @pl.when(k == pl.num_programs(0) - 1)
        def _():
            z = zacc_ref[...]            # (1, T) logits
            t = t_ref[...]               # (1, T) watermark bits
            # Stable BCE-with-logits == -[t*log(sigmoid(z)) + (1-t)*log(1-sigmoid(z))]
            bce = jnp.maximum(z, 0.0) - t * z + jnp.log1p(jnp.exp(-jnp.abs(z)))
            o_ref[0, 0] = jnp.sum(bce) * inv_T

    return kernel


def watermark_cross_entropy_loss(X, weights, targets, *, tk=None):
    """X: (T, M) secret matrix (f32 or bf16); weights: (B, C, H, W); targets: (T,) bits.

    Returns the scalar BCE loss matching WatermarkCrossEntropyLoss.forward.
    """
    T = X.shape[0]
    B = weights.shape[0]
    M = int(np.prod(weights.shape[1:]))
    assert X.shape == (T, M), (X.shape, (T, M))

    # Pre-reduce the filter mean in the wrapper when B is large (cuts weight HBM
    # traffic by B x and removes the per-step sublane reduce); keep in-kernel mean
    # for small B.
    W2d = weights.reshape(B, M)
    if B > _PRE_REDUCE_B_THRESHOLD:
        W2d = jnp.mean(W2d.astype(jnp.float32), axis=0, keepdims=True)
    B_eff = W2d.shape[0]

    Tg = targets.reshape(1, T).astype(jnp.float32)

    x_itemsize = jnp.dtype(X.dtype).itemsize
    w_itemsize = jnp.dtype(W2d.dtype).itemsize

    # ---- tiling ------------------------------------------------------------
    budget = _vmem_budget_bytes()
    M_pad = _round_up(M, 128)
    tk_sel = _pick_tk(M_pad, T, B_eff, x_itemsize, w_itemsize, tk, budget)
    grid_k = M_pad // tk_sel

    # Only pad along M if it is not lane-aligned (zeros contribute nothing to the
    # matvec). T needs no padding: a block dim equal to the full array dim is legal.
    if M_pad != M:
        Xp = jnp.zeros((T, M_pad), X.dtype).at[:, :M].set(X)
        Wp = jnp.zeros((B_eff, M_pad), W2d.dtype).at[:, :M].set(W2d)
    else:
        Xp, Wp = X, W2d

    cost = pl.CostEstimate(
        flops=2 * T * M,
        transcendentals=2 * T,
        bytes_accessed=T * M * x_itemsize + B_eff * M * w_itemsize + 4 * T + 4,
    )

    grid_spec = pltpu.PrefetchScalarGridSpec(
        num_scalar_prefetch=0,
        grid=(grid_k,),
        in_specs=[
            pl.BlockSpec((T, tk_sel), lambda k: (0, k)),       # X slab (dominant traffic)
            pl.BlockSpec((B_eff, tk_sel), lambda k: (0, k)),   # weights slab
            pl.BlockSpec((1, T), lambda k: (0, 0)),            # targets (resident)
        ],
        out_specs=pl.BlockSpec(memory_space=pltpu.MemorySpace.SMEM),
        scratch_shapes=[pltpu.VMEM((1, T), jnp.float32)],      # lane-dense z accumulator
    )

    out = pl.pallas_call(
        _make_kernel(T),
        out_shape=jax.ShapeDtypeStruct((1, 1), jnp.float32),
        grid_spec=grid_spec,
        cost_estimate=cost,
        compiler_params=pltpu.CompilerParams(
            dimension_semantics=("arbitrary",),   # reduction over M
            vmem_limit_bytes=budget,
        ),
    )(Xp, Wp, Tg)
    return out[0, 0]


def _reference_loss(X, weights, targets):
    """Direct transcription of the PyTorch forward (sigmoid + log BCE)."""
    w_mean = jnp.mean(weights.astype(jnp.float32), axis=0).reshape(-1)
    z = X.astype(jnp.float32) @ w_mean
    s = jax.nn.sigmoid(z)
    t = targets.astype(jnp.float32)
    return -jnp.mean(t * jnp.log(s) + (1.0 - t) * jnp.log(1.0 - s))


if __name__ == "__main__":
    key = jax.random.PRNGKey(0)
    k_x, k_w, k_t = jax.random.split(key, 3)

    # Small shapes consistent with the module's forward:
    #   weights: (B=2, C=4, H=16, W=16)  -> flattened M = 1024
    #   watermark length T = 64 bits     -> secret matrix X: (64, 1024)
    B, C, H, W = 2, 4, 16, 16
    T = 64
    M = C * H * W

    # Deterministic synthetic "secret matrix" (stand-in for get_secret_matrix)
    X = (jax.random.normal(k_x, (T, M), dtype=jnp.float32) * 0.1).astype(jnp.float32)
    weights = jax.random.normal(k_w, (B, C, H, W), dtype=jnp.float32)
    targets = jax.random.bernoulli(k_t, 0.5, (T,)).astype(jnp.float32)

    ref = jax.block_until_ready(_reference_loss(X, weights, targets))

    # 1) f32 streams with a forced small tile (tk=256 -> grid of 4 over M): exercises
    #    the K-accumulation / init / epilogue phases.
    loss = jax.block_until_ready(
        watermark_cross_entropy_loss(X, weights, targets, tk=256))
    assert np.allclose(np.asarray(loss), np.asarray(ref), rtol=1e-5, atol=1e-5), (loss, ref)

    # 2) Auto-sized tile (default path: whole M in one step for this small shape).
    loss_auto = jax.block_until_ready(
        watermark_cross_entropy_loss(X, weights, targets))
    assert np.allclose(np.asarray(loss_auto), np.asarray(ref), rtol=1e-5, atol=1e-5), (
        loss_auto, ref)

    # 3) bf16-streamed X (halves the dominant HBM traffic); f32 MXU accumulation,
    #    looser tolerance for the reduced input precision.
    loss_bf16 = jax.block_until_ready(
        watermark_cross_entropy_loss(X.astype(jnp.bfloat16), weights, targets, tk=256))
    assert np.allclose(np.asarray(loss_bf16), np.asarray(ref), rtol=5e-2, atol=5e-2), (
        loss_bf16, ref)

    print("KERNEL_OK")
</pallas_src>

<mosaic_0001>
module attributes {stable_mosaic.version = 11 : i64} {
  func.func @kernel(%arg0: i32, %arg1: memref<64x256xf32, #tpu.memory_space<vmem>>, %arg2: memref<2x256xf32, #tpu.memory_space<vmem>>, %arg3: memref<1x64xf32, #tpu.memory_space<vmem>>, %arg4: memref<1x1xf32, #tpu.memory_space<smem>>, %arg5: memref<1x64xf32, #tpu.memory_space<vmem>>) attributes {dimension_semantics = [#tpu.dimension_semantics<arbitrary>], iteration_bounds = array<i64: 4>, scalar_prefetch = 0 : i64, scratch_operands = 1 : i64, tpu.core_type = #tpu.core_type<tc>, window_params = [{transform_indices = @transform_0, window_bounds = array<i64: 64, 256>}, {transform_indices = @transform_1, window_bounds = array<i64: 2, 256>}, {pipeline_mode = #tpu.pipeline_mode<synchronous>, transform_indices = @transform_2, window_bounds = array<i64: 1, 64>}, {transform_indices = @transform_3, window_bounds = array<i64: 1, 1>}]} {
    %c0_i32 = arith.constant 0 : i32
    %0 = arith.cmpi eq, %arg0, %c0_i32 : i32
    %1 = arith.extui %0 : i1 to i32
    %c0_i32_0 = arith.constant 0 : i32
    %2 = arith.cmpi ne, %1, %c0_i32_0 : i32
    scf.if %2 {
      %cst_11 = arith.constant 0.000000e+00 : f32
      %16 = vector.broadcast %cst_11 : f32 to vector<1x64xf32>
      %c0_12 = arith.constant 0 : index
      %c0_13 = arith.constant 0 : index
      %17 = vector.load %arg5[%c0_12, %c0_13] : memref<1x64xf32, #tpu.memory_space<vmem>>, vector<1x64xf32>
      tpu.vector_store %arg5[%c0_12, %c0_13], %16 {strides = array<i32>} : memref<1x64xf32, #tpu.memory_space<vmem>>, vector<1x64xf32>,
    } else {
    }
    %c0 = arith.constant 0 : index
    %c0_1 = arith.constant 0 : index
    %3 = vector.load %arg2[%c0, %c0_1] : memref<2x256xf32, #tpu.memory_space<vmem>>, vector<2x256xf32>
    %cst = arith.constant dense<0.000000e+00> : vector<256xf32>
    %4 = vector.multi_reduction <add>, %3, %cst [0] : vector<2x256xf32> to vector<256xf32>
    %5 = vector.shape_cast %4 : vector<256xf32> to vector<1x256xf32>
    %cst_2 = arith.constant 2.000000e+00 : f32
    %6 = vector.broadcast %cst_2 : f32 to vector<1x256xf32>
    %7 = arith.divf %5, %6 : vector<1x256xf32>
    %c0_3 = arith.constant 0 : index
    %c0_4 = arith.constant 0 : index
    %8 = vector.load %arg5[%c0_3, %c0_4] : memref<1x64xf32, #tpu.memory_space<vmem>>, vector<1x64xf32>
    %c0_5 = arith.constant 0 : index
    %c0_6 = arith.constant 0 : index
    %9 = vector.load %arg1[%c0_5, %c0_6] : memref<64x256xf32, #tpu.memory_space<vmem>>, vector<64x256xf32>
    %cst_7 = arith.constant dense<0.000000e+00> : vector<1x64xf32>
    %10 = tpu.matmul %7, %9, %cst_7 {dimension_numbers = #tpu.dot_dimension_numbers<[1], [1], [0], [0], [0, 0, 1, 0], [], []>} : vector<1x256xf32>, vector<64x256xf32>, vector<1x64xf32> -> vector<1x64xf32>
    %11 = arith.addf %8, %10 : vector<1x64xf32>
    %c0_8 = arith.constant 0 : index
    %c0_9 = arith.constant 0 : index
    %12 = vector.load %arg5[%c0_8, %c0_9] : memref<1x64xf32, #tpu.memory_space<vmem>>, vector<1x64xf32>
    tpu.vector_store %arg5[%c0_8, %c0_9], %11 {strides = array<i32>} : memref<1x64xf32, #tpu.memory_space<vmem>>, vector<1x64xf32>,
    %c3_i32 = arith.constant 3 : i32
    %13 = arith.cmpi eq, %arg0, %c3_i32 : i32
    %14 = arith.extui %13 : i1 to i32
    %c0_i32_10 = arith.constant 0 : i32
    %15 = arith.cmpi ne, %14, %c0_i32_10 : i32
    scf.if %15 {
      %c0_11 = arith.constant 0 : index
      %c0_12 = arith.constant 0 : index
      %16 = vector.load %arg5[%c0_11, %c0_12] : memref<1x64xf32, #tpu.memory_space<vmem>>, vector<1x64xf32>
      %c0_13 = arith.constant 0 : index
      %c0_14 = arith.constant 0 : index
      %17 = vector.load %arg3[%c0_13, %c0_14] : memref<1x64xf32, #tpu.memory_space<vmem>>, vector<1x64xf32>
      %cst_15 = arith.constant 0.000000e+00 : f32
      %18 = vector.broadcast %cst_15 : f32 to vector<1x64xf32>
      %19 = arith.maximumf %16, %18 : vector<1x64xf32>
      %20 = arith.mulf %17, %16 : vector<1x64xf32>
      %21 = arith.subf %19, %20 : vector<1x64xf32>
      %22 = math.absf %16 : vector<1x64xf32>
      %cst_16 = arith.constant 0.000000e+00 : f32
      %23 = vector.broadcast %cst_16 : f32 to vector<1x64xf32>
      %24 = arith.subf %23, %22 : vector<1x64xf32>
      %25 = math.exp %24 : vector<1x64xf32>
      %26 = math.log1p %25 : vector<1x64xf32>
      %27 = arith.addf %21, %26 : vector<1x64xf32>
      %28 = vector.shape_cast %27 : vector<1x64xf32> to vector<1x1x64xf32>
      %cst_17 = arith.constant dense<0.000000e+00> : vector<1xf32>
      %29 = vector.multi_reduction <add>, %28, %cst_17 [1, 2] : vector<1x1x64xf32> to vector<1xf32>
      %30 = vector.shape_cast %29 : vector<1xf32> to vector<1x1x1xf32>
      %31 = vector.extract %30[0, 0, 0] : f32 from vector<1x1x1xf32>
      %cst_18 = arith.constant 1.562500e-02 : f32
      %32 = arith.mulf %31, %cst_18 : f32
      %c0_19 = arith.constant 0 : index
      %c0_20 = arith.constant 0 : index
      %33 = memref.load %arg4[%c0_19, %c0_20] : memref<1x1xf32, #tpu.memory_space<smem>>
      memref.store %32, %arg4[%c0_19, %c0_20] : memref<1x1xf32, #tpu.memory_space<smem>>
    } else {
    }
    return
  }
  func.func @transform_0(%arg0: i32) -> (i32, i32) {
    %c0_i32 = arith.constant 0 : i32
    %c0_i32_0 = arith.constant 0 : i32
    return %c0_i32, %arg0 : i32, i32
  }
  func.func @transform_1(%arg0: i32) -> (i32, i32) {
    %c0_i32 = arith.constant 0 : i32
    %c0_i32_0 = arith.constant 0 : i32
    return %c0_i32, %arg0 : i32, i32
  }
  func.func @transform_2(%arg0: i32) -> (i32, i32) {
    %c0_i32 = arith.constant 0 : i32
    %c0_i32_0 = arith.constant 0 : i32
    %c0_i32_1 = arith.constant 0 : i32
    return %c0_i32, %c0_i32_0 : i32, i32
  }
  func.func @transform_3(%arg0: i32) -> (i32, i32) {
    %c0_i32 = arith.constant 0 : i32
    %c0_i32_0 = arith.constant 0 : i32
    %c0_i32_1 = arith.constant 0 : i32
    return %c0_i32, %c0_i32_0 : i32, i32
  }
}

</mosaic_0001>

<llo_original>
// kernel: tpu_custom_call.1
$region0: #{tpu_custom_call.1}
  #allocation0 [shape = 'u32[]', space=smem, size = 0x4, offset = 0x4, fixed_abs, tag = 'smem constant byte address 0x4 - core index']
  #allocation1 [shape = 'u32[144,128]{1,0:T(1,128)}', space=vmem, size = 0x12000, scoped, tag = 'internal scratch']
  #allocation2 [shape = 'f32[1,64]{1,0:T(1,128)}', space=vmem, size = 0x200, scoped, tag = 'scratch operand']
  %s0 = inlined_call_operand.hbm [shape: f32[64,1024], index: 0, kind: input, shape index: {}]
  %s1 = inlined_call_operand.hbm [shape: f32[2,1024], index: 1, kind: input, shape index: {}]
  %s2 = inlined_call_operand.vmem [shape: f32[1,64], index: 2, kind: input, shape index: {}]
  %s3 = inlined_call_operand.hbm [shape: f32[1,1], index: 3, kind: output, shape index: {}]
  %s4 = sld [smem:[#allocation0]]
  $region61: #{tpu_custom_call.1} parent=0
    _
  %s6 = ssub.s32 1, %s4
  %s7 = scalar_select 0, %s6, %s4
  $region1: #{tpu_custom_call.1} parent=0
    #allocation3 [shape = 'u8[131072]{0}', space=vmem, size = 0x20000, scoped, tag = 'input window, operand 0']
    #allocation4 [shape = 's32[2]{0}', space=sflag, size = 0x8, scoped, tag = 'scoped memory for tpu_custom_call.1']
    #allocation5 [shape = 's32[2]{0}', space=sflag, size = 0x8, scoped, tag = 'scoped memory for tpu_custom_call.1']
    #allocation6 [shape = 'u8[4096]{0}', space=vmem, size = 0x1000, scoped, tag = 'input window, operand 1']
    #allocation7 [shape = 's32[2]{0}', space=sflag, size = 0x8, scoped, tag = 'scoped memory for tpu_custom_call.1']
    #allocation8 [shape = 'u8[512]{0}', space=smem, size = 0x200, scoped, tag = 'output window, operand 0, single buffered']
    %8 = vsyncpa [#allocation4], 0
    %s9 = scalar_lea.sflag [#allocation4], 1
    %10 = vsyncpa %s9, 0
    %11 = vsyncpa [#allocation7], 0
    %s12 = scalar_lea.sflag [#allocation7], 1
    %13 = vsyncpa %s12, 0
    %14 = vsyncpa [#allocation5], 0
    loop: start=0, step=1, limit=6
    $region2: #{tpu_custom_call.1} parent=1 // loop_pre_header
      _
    $region3: #{tpu_custom_call.1} parent=1 // loop_header
      %s16 = sphi 0, %s20
      %p17 = scmp.ge.s32.totalorder %s16, 6
      %s26 = sphi 0, %s28
      %s29 = sphi 0, %s26
      %s30 = sphi 0, %s29
      %s46 = sphi 0, %s30
      %s52 = sphi 0, %s54
      %s55 = sphi 0, %s52
      %s56 = sphi 0, %s55
      %s72 = sphi 0, %s56
      %s76 = sphi 0, %s76
      %s78 = sphi 0, %s76
      %s79 = sphi 0, %s78
      %s93 = sphi 0, %s79
      %s97 = sphi 0, %s97
      %s99 = sphi 0, %s97
      %s100 = sphi 0, %s99
      %s114 = sphi 0, %s100
    $region4: #{tpu_custom_call.1} parent=1 // loop_header_branch
      %19 = sbr.rel (%p17) target = $region8
    $region5: #{tpu_custom_call.1} parent=1 // loop_body
      %s21 = ssub.s32 %s16, 1
      %s22 = ssub.s32 %s16, 2
      %s23 = sadd.s32 %s16, 1
      %s24 = ssub.s32 %s16, %s23
      %p25 = scmp.eq.s32.totalorder %s24, 0
      %s27 = sadd.s32 %s26, 1
      %s28 = scalar_select %p25, %s26, %s27
      %p31 = pneg %p25
      %p32 = scmp.eq.s32.totalorder %s16, 3
      %p33 = por %p31, %p32
      %p34 = scmp.ne.s32.totalorder %s26, %s29
      %p35 = scmp.eq.s32.totalorder %s16, 0
      %p36 = por %p34, %p35
      %p37 = scmp.ne.s32.totalorder %s26, %s29
      %p38 = scmp.eq.s32.totalorder %s21, 3
      %p39 = por %p37, %p38
      %p40 = scmp.ne.s32.totalorder %s29, %s30
      %p41 = scmp.eq.s32.totalorder %s21, 0
      %p42 = por %p40, %p41
      %p43 = scmp.ne.s32.totalorder %s29, %s30
      %p44 = scmp.eq.s32.totalorder %s22, 3
      %p45 = por %p43, %p44
      %p47 = scmp.ne.s32.totalorder %s30, %s46
      %p48 = scmp.eq.s32.totalorder %s22, 0
      %p49 = por %p47, %p48
      %s50 = ssub.s32 %s16, %s23
      %p51 = scmp.eq.s32.totalorder %s50, 0
      %s53 = sadd.s32 %s52, 1
      %s54 = scalar_select %p51, %s52, %s53
      %p57 = pneg %p51
      %p58 = scmp.eq.s32.totalorder %s16, 3
      %p59 = por %p57, %p58
      %p60 = scmp.ne.s32.totalorder %s52, %s55
      %p61 = scmp.eq.s32.totalorder %s16, 0
      %p62 = por %p60, %p61
      %p63 = scmp.ne.s32.totalorder %s52, %s55
      %p64 = scmp.eq.s32.totalorder %s21, 3
      %p65 = por %p63, %p64
      %p66 = scmp.ne.s32.totalorder %s55, %s56
      %p67 = scmp.eq.s32.totalorder %s21, 0
      %p68 = por %p66, %p67
      %p69 = scmp.ne.s32.totalorder %s55, %s56
      %p70 = scmp.eq.s32.totalorder %s22, 3
      %p71 = por %p69, %p70
      %p73 = scmp.ne.s32.totalorder %s56, %s72
      %p74 = scmp.eq.s32.totalorder %s22, 0
      %p75 = por %p73, %p74
      %s77 = sadd.s32 %s76, 1
      %p80 = scmp.eq.s32.totalorder %s16, 3
      %p81 = scmp.ne.s32.totalorder %s76, %s78
      %p82 = scmp.eq.s32.totalorder %s16, 0
      %p83 = por %p81, %p82
      %p84 = scmp.ne.s32.totalorder %s76, %s78
      %p85 = scmp.eq.s32.totalorder %s21, 3
      %p86 = por %p84, %p85
      %p87 = scmp.ne.s32.totalorder %s78, %s79
      %p88 = scmp.eq.s32.totalorder %s21, 0
      %p89 = por %p87, %p88
      %p90 = scmp.ne.s32.totalorder %s78, %s79
      %p91 = scmp.eq.s32.totalorder %s22, 3
      %p92 = por %p90, %p91
      %p94 = scmp.ne.s32.totalorder %s79, %s93
      %p95 = scmp.eq.s32.totalorder %s22, 0
      %p96 = por %p94, %p95
      %s98 = sadd.s32 %s97, 1
      %p101 = scmp.eq.s32.totalorder %s16, 3
      %p102 = scmp.ne.s32.totalorder %s97, %s99
      %p103 = scmp.eq.s32.totalorder %s16, 0
      %p104 = por %p102, %p103
      %p105 = scmp.ne.s32.totalorder %s97, %s99
      %p106 = scmp.eq.s32.totalorder %s21, 3
      %p107 = por %p105, %p106
      %p108 = scmp.ne.s32.totalorder %s99, %s100
      %p109 = scmp.eq.s32.totalorder %s21, 0
      %p110 = por %p108, %p109
      %p111 = scmp.ne.s32.totalorder %s99, %s100
      %p112 = scmp.eq.s32.totalorder %s22, 3
      %p113 = por %p111, %p112
      %p115 = scmp.ne.s32.totalorder %s100, %s114
      %p116 = scmp.eq.s32.totalorder %s22, 0
      %p117 = por %p115, %p116
      %p118 = scmp.le.s32.totalorder 1, %s16
      %p119 = scmp.lt.s32.totalorder %s16, 5
      %p120 = pnand %p118, %p119
      %p121 = pneg %p120
      // Predicated region
      $region9: #{tpu_custom_call.1} parent=5 // pred_check
        _
      $region10: #{tpu_custom_call.1} parent=5 // pred_check_branch
        %123 = sbr.rel (%p120) target = $region12
      $region11: #{tpu_custom_call.1} parent=5 // pred_region
        %s124 = ssub.s32 %s16, 1
        // Predicated region
        $region13: #{tpu_custom_call.1} parent=11 // pred_check
          %p125 = pneg %p89
        $region14: #{tpu_custom_call.1} parent=11 // pred_check_branch
          %127 = sbr.rel (%p125) target = $region16
        $region15: #{tpu_custom_call.1} parent=11 // pred_region
          _
        $region16: #{tpu_custom_call.1} parent=11 // pred_fallthru
          _
      $region12: #{tpu_custom_call.1} parent=5 // pred_fallthru
        _
      %p128 = scmp.lt.s32.totalorder %s16, 4
      // Predicated region
      $region17: #{tpu_custom_call.1} parent=5 // pred_check
        %p129 = pneg %p128
      $region18: #{tpu_custom_call.1} parent=5 // pred_check_branch
        %131 = sbr.rel (%p129) target = $region20
      $region19: #{tpu_custom_call.1} parent=5 // pred_region
        // Predicated region
        $region21: #{tpu_custom_call.1} parent=19 // pred_check
          %p132 = pneg %p36
        $region22: #{tpu_custom_call.1} parent=19 // pred_check_branch
          %134 = sbr.rel (%p132) target = $region24
        $region23: #{tpu_custom_call.1} parent=19 // pred_region
          %s135 = sand.u32 %s26, 1
          %s136 = scalar_lea.sflag [#allocation4], %s135
          %s137 = sand.u32 %s26, 1
          %s138 = smul.addr %s137, 128
          %s139 = scalar_lea.vmem [#allocation3], %s138
          %s140 = smul.u32 2, %s16
          %s142 = ssub.s32 2048, 2048
          %143 = vsyncadd %s136, %s142
          %s144 = smul.addr %s140, 128
          %s145 = scalar_lea.hbm %s0, %s144
          %s146 = sshll.u32 %s139, 4
          %s147 = int_to_ptr.vmem [resolvable:$true] %s146
          %152 = dma.hbm_to_vmem [thread:$0]  %s145, 2048, %s147, %s136, 1024, 256, 16
        $region24: #{tpu_custom_call.1} parent=19 // pred_fallthru
          _
        // Predicated region
        $region25: #{tpu_custom_call.1} parent=19 // pred_check
          %p153 = pneg %p62
        $region26: #{tpu_custom_call.1} parent=19 // pred_check_branch
          %155 = sbr.rel (%p153) target = $region28
        $region27: #{tpu_custom_call.1} parent=19 // pred_region
          %s156 = sand.u32 %s52, 1
          %s157 = scalar_lea.sflag [#allocation7], %s156
          %s158 = sand.u32 %s52, 1
          %s159 = smul.addr %s158, 4
          %s160 = scalar_lea.vmem [#allocation6], %s159
          %s161 = smul.u32 2, %s16
          %s163 = ssub.s32 64, 64
          %164 = vsyncadd %s157, %s163
          %s165 = smul.addr %s161, 32
          %s166 = scalar_lea.hbm %s1, %s165
          %s168 = sshll.u32 %s160, 4
          %s169 = int_to_ptr.vmem [resolvable:$true] %s168
          %171 = dma.hbm_to_vmem [thread:$0]  %s166, 64, %s169, %s157
        $region28: #{tpu_custom_call.1} parent=19 // pred_fallthru
          _
      $region20: #{tpu_custom_call.1} parent=5 // pred_fallthru
        _
      %p172 = scmp.le.s32.totalorder 1, %s16
      %p173 = scmp.lt.s32.totalorder %s16, 5
      %p174 = pnand %p172, %p173
      %p175 = pneg %p174
      // Predicated region
      $region29: #{tpu_custom_call.1} parent=5 // pred_check
        _
      $region30: #{tpu_custom_call.1} parent=5 // pred_check_branch
        %177 = sbr.rel (%p174) target = $region32
      $region31: #{tpu_custom_call.1} parent=5 // pred_region
        %s178 = ssub.s32 %s16, 1
        %s179 = sand.u32 %s29, 1
        %s180 = scalar_lea.sflag [#allocation4], %s179
        %s181 = sand.u32 %s29, 1
        %s182 = smul.addr %s181, 128
        %s183 = scalar_lea.vmem [#allocation3], %s182
        // Predicated region
        $region33: #{tpu_custom_call.1} parent=31 // pred_check
          %p184 = pneg %p42
        $region34: #{tpu_custom_call.1} parent=31 // pred_check_branch
          %186 = sbr.rel (%p184) target = $region36
        $region35: #{tpu_custom_call.1} parent=31 // pred_region
          %187 = dma.done %s180, 2048
        $region36: #{tpu_custom_call.1} parent=31 // pred_fallthru
          _
        %s188 = sand.u32 %s55, 1
        %s189 = scalar_lea.sflag [#allocation7], %s188
        %s190 = sand.u32 %s55, 1
        %s191 = smul.addr %s190, 4
        %s192 = scalar_lea.vmem [#allocation6], %s191
        // Predicated region
        $region37: #{tpu_custom_call.1} parent=31 // pred_check
          %p193 = pneg %p68
        $region38: #{tpu_custom_call.1} parent=31 // pred_check_branch
          %195 = sbr.rel (%p193) target = $region40
        $region39: #{tpu_custom_call.1} parent=31 // pred_region
          %196 = dma.done %s189, 64
        $region40: #{tpu_custom_call.1} parent=31 // pred_fallthru
          _
        %s197 = sand.u32 %s29, 1
        %s198 = scalar_lea.sflag [#allocation4], %s197
        %s199 = sand.u32 %s29, 1
        %s200 = smul.addr %s199, 128
        %s201 = scalar_lea.vmem [#allocation3], %s200
        %p202 = pneg %p42
        %p203 = pneg %p39
        %s204 = sand.u32 %s55, 1
        %s205 = scalar_lea.sflag [#allocation7], %s204
        %s206 = sand.u32 %s55, 1
        %s207 = smul.addr %s206, 4
        %s208 = scalar_lea.vmem [#allocation6], %s207
        %p209 = pneg %p68
        %p210 = pneg %p65
        %p211 = pneg %p89
        %p212 = pneg %p86
        %p213 = pneg %p110
        %p214 = pneg %p107
        %s215 = smul.u32 2, %s21
        %s216 = smul.u32 2, %s21
        %p217 = scmp.eq.s32.totalorder %s21, 0
        // Predicated region
        $region41: #{tpu_custom_call.1} parent=31 // pred_check
          %p218 = pneg %p217
        $region42: #{tpu_custom_call.1} parent=31 // pred_check_branch
          %220 = sbr.rel (%p218) target = $region44
        $region43: #{tpu_custom_call.1} parent=31 // pred_region
          %vm221 = vcmask 516096
          %222 = vst.msk [vmem:[#allocation2] sm:$0x1] %vm221, 0.0
        $region44: #{tpu_custom_call.1} parent=31 // pred_fallthru
          _
        %v223 = vld [vmem:[%s192] sm:$0xf]
        %v226 = vunpack.c.l.s4 1983009808
        %v227 = vunpack.c.0.s8 %v226
        %v228 = vlaneseq
        %v229 = vshrl.u32 %v228, 7
        %v230 = vsub.s32 %v227, %v229
        %v231 = vrot.slane %v223, %v230
        %v232 = vcombine.high %v231, %v231
        %vm235 = vcmask 1041408
        %v236 = vsel %vm235, %v231, 0.0
        %v237 = vrot.slane %v236, 4
        %v238 = vadd.f32 %v236, %v237
        %v239 = vrot.slane %v238, 2
        %v240 = vadd.f32 %v238, %v239
        %v241 = vrot.slane %v240, 1
        %v242 = vadd.f32 %v240, %v241
        %v243 = vsel %vm235, %v232, 0.0
        %v244 = vrot.slane %v243, 4
        %v245 = vadd.f32 %v243, %v244
        %v246 = vrot.slane %v245, 2
        %v247 = vadd.f32 %v245, %v246
        %v248 = vrot.slane %v247, 1
        %v249 = vadd.f32 %v247, %v248
        %v250 = vrcp.pop 2.0
        %v251 = vmul.f32 %v242, %v250
        %v252 = vmul.f32 %v249, %v250
        %v253 = vld [vmem:[#allocation2] sm:$0x1]
        %v254 = vld [vmem:[%s183] sm:$0xff]
        %v255 = vld [vmem:[%s183 + $0x8] sm:$0xff]
        %v256 = vld [vmem:[%s183 + $0x10] sm:$0xff]
        %v257 = vld [vmem:[%s183 + $0x18] sm:$0xff]
        %v258 = vld [vmem:[%s183 + $0x20] sm:$0xff]
        %v259 = vld [vmem:[%s183 + $0x28] sm:$0xff]
        %v260 = vld [vmem:[%s183 + $0x30] sm:$0xff]
        %v261 = vld [vmem:[%s183 + $0x38] sm:$0xff]
        %v262 = vld [vmem:[%s183 + $0x40] sm:$0xff]
        %v263 = vld [vmem:[%s183 + $0x48] sm:$0xff]
        %v264 = vld [vmem:[%s183 + $0x50] sm:$0xff]
        %v265 = vld [vmem:[%s183 + $0x58] sm:$0xff]
        %v266 = vld [vmem:[%s183 + $0x60] sm:$0xff]
        %v267 = vld [vmem:[%s183 + $0x68] sm:$0xff]
        %v268 = vld [vmem:[%s183 + $0x70] sm:$0xff]
        %v269 = vld [vmem:[%s183 + $0x78] sm:$0xff]
        %270 = vmatprep.subr.mxu0 %v255
        %271 = vmatpush1.xpose.msra.mxu0 %v254
        %272 = vmatprep.subr.mxu0 %v257
        %273 = vmatpush1.xpose.msra.mxu0 %v256
        %274 = vmatprep.subr.mxu0 %v259
        %275 = vmatpush1.xpose.msra.mxu0 %v258
        %276 = vmatprep.subr.mxu0 %v261
        %277 = vmatpush1.xpose.msra.mxu0 %v260
        %278 = vmatprep.subr.mxu0 %v263
        %279 = vmatpush1.xpose.msra.mxu0 %v262
        %280 = vmatprep.subr.mxu0 %v265
        %281 = vmatpush1.xpose.msra.mxu0 %v264
        %282 = vmatprep.subr.mxu0 %v267
        %283 = vmatpush1.xpose.msra.mxu0 %v266
        %284 = vmatprep.subr.mxu0 %v269
        %285 = vmatpush1.xpose.msra.mxu0 %v268
        %286 = vmatprep.subr.mxu0 0.0
        %287 = vmatpush1.xpose.msra.mxu0 0.0
        %288 = vmatprep.subr.mxu0 0.0
        %289 = vmatpush1.xpose.msra.mxu0 0.0
        %290 = vmatprep.subr.mxu0 0.0
        %291 = vmatpush1.xpose.msra.mxu0 0.0
        %292 = vmatprep.subr.mxu0 0.0
        %293 = vmatpush1.xpose.msra.mxu0 0.0
        %294 = vmatprep.subr.mxu0 0.0
        %295 = vmatpush1.xpose.msra.mxu0 0.0
        %296 = vmatprep.subr.mxu0 0.0
        %297 = vmatpush1.xpose.msra.mxu0 0.0
        %298 = vmatprep.subr.mxu0 0.0
        %299 = vmatpush1.xpose.msra.mxu0 0.0
        %300 = vmatprep.subr.mxu0 0.0
        %301 = vmatpush1.xpose.msra.mxu0 0.0
        %302 = vmatprep.subr.mxu0 0.0
        %303 = vmatpush1.xpose.msra.mxu0 0.0
        %304 = vmatprep.subr.mxu0 0.0
        %305 = vmatpush1.xpose.msra.mxu0 0.0
        %306 = vmatprep.subr.mxu0 0.0
        %307 = vmatpush1.xpose.msra.mxu0 0.0
        %308 = vmatprep.subr.mxu0 0.0
        %309 = vmatpush1.xpose.msra.mxu0 0.0
        %310 = vmatprep.subr.mxu0 0.0
        %311 = vmatpush1.xpose.msra.mxu0 0.0
        %312 = vmatprep.subr.mxu0 0.0
        %313 = vmatpush1.xpose.msra.mxu0 0.0
        %314 = vmatprep.subr.mxu0 0.0
        %315 = vmatpush1.xpose.msra.mxu0 0.0
        %316 = vmatprep.subr.mxu0 0.0
        %317 = vmatpush1.xpose.msra.mxu0 0.0
        %318 = vmatprep.subr.mxu0 0.0
        %319 = vmatpush1.xpose.msra.mxu0 0.0
        %320 = vmatprep.subr.mxu0 0.0
        %321 = vmatpush1.xpose.msra.mxu0 0.0
        %322 = vmatprep.subr.mxu0 0.0
        %323 = vmatpush1.xpose.msra.mxu0 0.0
        %324 = vmatprep.subr.mxu0 0.0
        %325 = vmatpush1.xpose.msra.mxu0 0.0
        %326 = vmatprep.subr.mxu0 0.0
        %327 = vmatpush1.xpose.msra.mxu0 0.0
        %328 = vmatprep.subr.mxu0 0.0
        %329 = vmatpush1.xpose.msra.mxu0 0.0
        %330 = vmatprep.subr.mxu0 0.0
        %331 = vmatpush1.xpose.msra.mxu0 0.0
        %332 = vmatprep.subr.mxu0 0.0
        %333 = vmatpush1.xpose.msra.mxu0 0.0
        %334 = vmatprep.mubr.f32.mxu0 %v252
        %335 = vmatmul.mubr.f32.gmra.mrb[0].mxu0 %v251
        %v336 = vpop.f32.mrb[0].mxu0
        %v337 = vadd.f32 0.0, %v336
        %v338 = vpop.f32.mrb[0].mxu0
        %339 = vdwg.mxu0
        %v340 = vadd.f32 %v253, %v337
        %vm341 = vcmask 516096
        %342 = vst.msk [vmem:[#allocation2] sm:$0x1] %vm341, %v340
        %p343 = scmp.eq.s32.totalorder %s21, 3
        // Predicated region
        $region45: #{tpu_custom_call.1} parent=31 // pred_check
          %p344 = pneg %p343
        $region46: #{tpu_custom_call.1} parent=31 // pred_check_branch
          %346 = sbr.rel (%p344) target = $region48
        $region47: #{tpu_custom_call.1} parent=31 // pred_region
          %v347 = vld [vmem:[#allocation2] sm:$0x1]
          %v348 = vld [vmem:[%s2] sm:$0x1]
          %v349 = vmax.f32 %v347, 0.0
          %v350 = vmul.f32 %v348, %v347
          %v351 = vsub.f32 %v349, %v350
          %v352 = vand.u32 2147483647, %v347
          %v353 = vsub.f32 0.0, %v352
          %v354 = vmul.f32 %v353, 1.442695
          %v355 = vpow.pop %v354
          %v356 = vadd.f32 %v355, 1.0
          %v357 = vlog2.pop %v356
          %v358 = vmul.f32 %v357, 0.6931472
          %v359 = vmul.f32 -0.5, %v355
          %v360 = vadd.f32 %v359, 1.0
          %v361 = vmul.f32 %v360, %v355
          %v362 = vand.u32 2147483647, %v355
          %vm363 = vcmp.lt.f32.partialorder %v362, 0.0004427343
          %v364 = vsel %vm363, %v361, %v358
          %v365 = vadd.f32 %v351, %v364
          %v366 = vsel %vm341, %v365, 0.0
          %367 = vadd.xlane.f32.xlu0 %v366
          %v368 = vpop.xlane.xlu0 %367
          %v369 = vrot.slane %v368, 4
          %v370 = vadd.f32 %v368, %v369
          %v371 = vrot.slane %v370, 2
          %v372 = vadd.f32 %v370, %v371
          %v373 = vrot.slane %v372, 1
          %v374 = vadd.f32 %v372, %v373
          %s375 = vtos %v374
          %s376 = smul.f32 %s375, 0.015625
          %s377 = scalar_lea.smem [#allocation8], 0
          %378 = sst [smem:[%s377]] %s376
        $region48: #{tpu_custom_call.1} parent=31 // pred_fallthru
          _
        // Predicated region
        $region49: #{tpu_custom_call.1} parent=31 // pred_check
          %p379 = pneg %p107
        $region50: #{tpu_custom_call.1} parent=31 // pred_check_branch
          %381 = sbr.rel (%p379) target = $region52
        $region51: #{tpu_custom_call.1} parent=31 // pred_region
          %s383 = ssub.s32 16, 16
          %384 = vsyncadd [#allocation5], %s383
          %387 = dma.smem_to_hbm [#allocation8], 16, %s3, [#allocation5]
        $region52: #{tpu_custom_call.1} parent=31 // pred_fallthru
          _
        // Predicated region
        $region53: #{tpu_custom_call.1} parent=31 // pred_check
          %p388 = pneg %p107
        $region54: #{tpu_custom_call.1} parent=31 // pred_check_branch
          %390 = sbr.rel (%p388) target = $region56
        $region55: #{tpu_custom_call.1} parent=31 // pred_region
          %391 = dma.done [#allocation5], 16
        $region56: #{tpu_custom_call.1} parent=31 // pred_fallthru
          _
        %392 = sfence
      $region32: #{tpu_custom_call.1} parent=5 // pred_fallthru
        _
      %p393 = scmp.le.s32.totalorder 2, %s16
      // Predicated region
      $region57: #{tpu_custom_call.1} parent=5 // pred_check
        %p394 = pneg %p393
      $region58: #{tpu_custom_call.1} parent=5 // pred_check_branch
        %396 = sbr.rel (%p394) target = $region60
      $region59: #{tpu_custom_call.1} parent=5 // pred_region
        %s397 = ssub.s32 %s16, 2
      $region60: #{tpu_custom_call.1} parent=5 // pred_fallthru
        _
    $region6: #{tpu_custom_call.1} parent=1 // loop_footer
      %s20 = sadd.s32 1, %s16
    $region7: #{tpu_custom_call.1} parent=1 // loop_footer_branch
      %15 = sbr.rel target = $region3
    $region8: #{tpu_custom_call.1} parent=1 // loop_exit
      _
    %398 = vsyncpa [#allocation4], 1
    %s399 = scalar_lea.sflag [#allocation4], 1
    %400 = vsyncpa %s399, 1
    %401 = vsyncpa [#allocation7], 1
    %s402 = scalar_lea.sflag [#allocation7], 1
    %403 = vsyncpa %s402, 1
    %404 = vsyncpa [#allocation5], 1
    %s405 = scalar_lea.sflag [#allocation5], 1
    %406 = vsyncpa %s405, 1

</llo_original>
